<compile_context>
chip_gen: v5e
topology: v5e:2x2
jax: 0.10.0
libtpu: 0.0.40
codegen_flags: <defaults>
</compile_context>

<pallas_src>
import math

import jax
import jax.numpy as jnp
from jax import lax
from jax.experimental import pallas as pl
from jax.experimental.pallas import tpu as pltpu

# ---------------- model hyperparameters (small, SAB-consistent) -------------
BATCH = 2
SEQ = 8            # number of set elements N
INPUT_SIZE = 32    # must equal LATENT for the SAB residual (Q + attn(Q, Q))
LATENT = 32        # latent_size (dim_V)
HIDDEN = 32        # hidden_size of the MLP
NUM_HEADS = 4
DH = LATENT // NUM_HEADS   # per-head dim


def _sab_kernel(x_ref, wqkv_ref, bqkv_ref, wo_ref, bpk_ref, w1_ref, w2_ref,
                o_ref):
    # Whole batch as one block: (B, N, D) -> (B*N, D) for the big matmuls.
    x2d = x_ref[...].reshape(BATCH * SEQ, INPUT_SIZE)

    # ---- fused Q/K/V projection: one (B*N, D) @ (D, 3*LATENT) MXU pass ----
    # (the 1/sqrt(LATENT) score scale is already folded into the Q columns)
    qkv = jnp.dot(x2d, wqkv_ref[...],
                  preferred_element_type=jnp.float32) + bqkv_ref[...]

    contract_last = (((1,), (1,)), ((), ()))  # q·kᵀ without an explicit transpose

    # ---- per-(batch, head) attention with output projection folded in ----
    attn_blocks = []
    for b in range(BATCH):
        r0 = b * SEQ
        acc = jnp.zeros((SEQ, LATENT), jnp.float32)
        for h in range(NUM_HEADS):
            c = h * DH
            qh = qkv[r0:r0 + SEQ, c:c + DH]                              # pre-scaled
            kh = qkv[r0:r0 + SEQ, LATENT + c:LATENT + c + DH]
            vh = qkv[r0:r0 + SEQ, 2 * LATENT + c:2 * LATENT + c + DH]

            e = lax.dot_general(qh, kh, contract_last,
                                preferred_element_type=jnp.float32)      # (N, N)
            e = e - jnp.max(e, axis=-1, keepdims=True)
            p = jnp.exp(e)
            a = p * pl.reciprocal(jnp.sum(p, axis=-1, keepdims=True),
                                  approx=True)                           # softmax rows
            oh = jnp.dot(a, vh, preferred_element_type=jnp.float32)      # (N, DH)
            # o_cat @ wo == sum_h o_h @ wo[h*DH:(h+1)*DH, :]  (no lane concat)
            acc = acc + jnp.dot(oh, wo_ref[c:c + DH, :],
                                preferred_element_type=jnp.float32)
        attn_blocks.append(acc)

    attn = jnp.concatenate(attn_blocks, axis=0) + bpk_ref[0:1, :]        # (B*N, LATENT)

    # ---- residual + feed-forward MLP + residual ----
    x1 = x2d + attn                                                      # alpha0 = 1
    # TODO(synk): nn.Dropout(0.1) is identity in eval mode; not implemented.
    h1 = jnp.maximum(
        jnp.dot(x1, w1_ref[...], preferred_element_type=jnp.float32) + bpk_ref[1:2, :],
        0.0)
    x2 = x1 + jnp.dot(h1, w2_ref[...],
                      preferred_element_type=jnp.float32) + bpk_ref[2:3, :]

    o_ref[...] = x2.reshape(BATCH, SEQ, LATENT)


def sab_forward(x, params):
    """x: (B, N, INPUT_SIZE) float32. params: dict of pre-transposed weights."""
    B, N, D = x.shape
    assert D == INPUT_SIZE and INPUT_SIZE == LATENT, \
        "SAB residual X + attn(X) requires input_size == latent_size"
    assert LATENT % NUM_HEADS == 0
    assert HIDDEN == LATENT, "bias packing below assumes hidden_size == latent_size"

    # Fold the score scale into the Q projection; fuse Q/K/V weights & biases.
    scale = 1.0 / math.sqrt(LATENT)  # PyTorch code scales by sqrt(latent_size)
    wqkv = jnp.concatenate(
        [params["wq"] * scale, params["wk"], params["wv"]], axis=1)      # (D, 3*LATENT)
    bqkv = jnp.concatenate(
        [params["bq"] * scale, params["bk"], params["bv"]], axis=1)      # (1, 3*LATENT)
    bpk = jnp.concatenate(
        [params["bo"], params["b1"], params["b2"]], axis=0)              # (3, LATENT)

    vmem = pl.BlockSpec(memory_space=pltpu.MemorySpace.VMEM)
    return pl.pallas_call(
        _sab_kernel,
        out_shape=jax.ShapeDtypeStruct((B, N, LATENT), jnp.float32),
        in_specs=[vmem] * 7,
        out_specs=vmem,
    )(x, wqkv, bqkv, params["wo"], bpk, params["w1"], params["w2"])


def sab_reference(x, p):
    """Plain-JAX mirror of the PyTorch SAB forward (eval mode)."""
    q = x @ p["wq"] + p["bq"]
    k = x @ p["wk"] + p["bk"]
    v = x @ p["wv"] + p["bv"]
    B, N, _ = x.shape
    qh = q.reshape(B, N, NUM_HEADS, DH).transpose(2, 0, 1, 3)  # (H,B,N,DH)
    kh = k.reshape(B, N, NUM_HEADS, DH).transpose(2, 0, 1, 3)
    vh = v.reshape(B, N, NUM_HEADS, DH).transpose(2, 0, 1, 3)
    e = jnp.einsum("hbnd,hbmd->hbnm", qh, kh) / math.sqrt(LATENT)
    a = jax.nn.softmax(e, axis=-1)
    o = jnp.einsum("hbnm,hbmd->hbnd", a, vh)                   # (H,B,N,DH)
    o = o.transpose(1, 2, 0, 3).reshape(B, N, LATENT)
    attn = o @ p["wo"] + p["bo"]
    x1 = x + attn
    h1 = jax.nn.relu(x1 @ p["w1"] + p["b1"])
    return x1 + h1 @ p["w2"] + p["b2"]


def init_params(key):
    ks = jax.random.split(key, 12)
    s = 0.1

    def w(k, shape):
        return jax.random.normal(k, shape, jnp.float32) * s

    return {
        "wq": w(ks[0], (INPUT_SIZE, LATENT)), "bq": w(ks[1], (1, LATENT)),
        "wk": w(ks[2], (INPUT_SIZE, LATENT)), "bk": w(ks[3], (1, LATENT)),
        "wv": w(ks[4], (INPUT_SIZE, LATENT)), "bv": w(ks[5], (1, LATENT)),
        "wo": w(ks[6], (LATENT, LATENT)),     "bo": w(ks[7], (1, LATENT)),
        "w1": w(ks[8], (LATENT, HIDDEN)),     "b1": w(ks[9], (1, HIDDEN)),
        "w2": w(ks[10], (HIDDEN, LATENT)),    "b2": w(ks[11], (1, LATENT)),
    }


if __name__ == "__main__":
    key = jax.random.PRNGKey(0)
    k_x, k_p = jax.random.split(key)
    x = jax.random.normal(k_x, (BATCH, SEQ, INPUT_SIZE), jnp.float32)
    params = init_params(k_p)

    out = sab_forward(x, params)
    out = jax.block_until_ready(out)

    ref = sab_reference(x, params)
    assert out.shape == (BATCH, SEQ, LATENT)
    # Slightly relaxed tolerance to cover the EUP approx-reciprocal softmax path.
    assert jnp.allclose(out, ref, rtol=2e-3, atol=2e-3), "mismatch vs reference"

    print("KERNEL_OK")
</pallas_src>

<mosaic_0001>
module attributes {stable_mosaic.version = 11 : i64} {
  func.func @_sab_kernel(%arg0: memref<2x8x32xf32, #tpu.memory_space<vmem>>, %arg1: memref<32x96xf32, #tpu.memory_space<vmem>>, %arg2: memref<1x96xf32, #tpu.memory_space<vmem>>, %arg3: memref<32x32xf32, #tpu.memory_space<vmem>>, %arg4: memref<3x32xf32, #tpu.memory_space<vmem>>, %arg5: memref<32x32xf32, #tpu.memory_space<vmem>>, %arg6: memref<32x32xf32, #tpu.memory_space<vmem>>, %arg7: memref<2x8x32xf32, #tpu.memory_space<vmem>>) attributes {dimension_semantics = [], scalar_prefetch = 0 : i64, scratch_operands = 0 : i64, tpu.core_type = #tpu.core_type<tc>} {
    %c0 = arith.constant 0 : index
    %c0_0 = arith.constant 0 : index
    %c0_1 = arith.constant 0 : index
    %0 = vector.load %arg0[%c0, %c0_0, %c0_1] : memref<2x8x32xf32, #tpu.memory_space<vmem>>, vector<2x8x32xf32>
    %1 = vector.shape_cast %0 : vector<2x8x32xf32> to vector<16x32xf32>
    %c0_2 = arith.constant 0 : index
    %c0_3 = arith.constant 0 : index
    %2 = vector.load %arg1[%c0_2, %c0_3] : memref<32x96xf32, #tpu.memory_space<vmem>>, vector<32x96xf32>
    %cst = arith.constant dense<0.000000e+00> : vector<16x96xf32>
    %3 = tpu.matmul %1, %2, %cst {dimension_numbers = #tpu.dot_dimension_numbers<[1], [0], [0], [1], [0, 0, 1, 1], [], []>} : vector<16x32xf32>, vector<32x96xf32>, vector<16x96xf32> -> vector<16x96xf32>
    %c0_4 = arith.constant 0 : index
    %c0_5 = arith.constant 0 : index
    %4 = vector.load %arg2[%c0_4, %c0_5] : memref<1x96xf32, #tpu.memory_space<vmem>>, vector<1x96xf32>
    %5 = vector.broadcast %4 : vector<1x96xf32> to vector<16x96xf32>
    %6 = arith.addf %3, %5 : vector<16x96xf32>
    %cst_6 = arith.constant 0.000000e+00 : f32
    %7 = vector.broadcast %cst_6 : f32 to vector<8x32xf32>
    %8 = vector.extract_strided_slice %6 {offsets = [0, 0], sizes = [8, 8], strides = [1, 1]} : vector<16x96xf32> to vector<8x8xf32>
    %9 = vector.extract_strided_slice %6 {offsets = [0, 32], sizes = [8, 8], strides = [1, 1]} : vector<16x96xf32> to vector<8x8xf32>
    %10 = vector.extract_strided_slice %6 {offsets = [0, 64], sizes = [8, 8], strides = [1, 1]} : vector<16x96xf32> to vector<8x8xf32>
    %cst_7 = arith.constant dense<0.000000e+00> : vector<8x8xf32>
    %11 = tpu.matmul %8, %9, %cst_7 {dimension_numbers = #tpu.dot_dimension_numbers<[1], [1], [0], [0], [0, 0, 1, 0], [], []>} : vector<8x8xf32>, vector<8x8xf32>, vector<8x8xf32> -> vector<8x8xf32>
    %cst_8 = arith.constant dense<0xFF800000> : vector<8xf32>
    %12 = vector.multi_reduction <maximumf>, %11, %cst_8 [1] : vector<8x8xf32> to vector<8xf32>
    %13 = vector.shape_cast %12 : vector<8xf32> to vector<8x1xf32>
    %14 = vector.broadcast %13 : vector<8x1xf32> to vector<8x8xf32>
    %15 = arith.subf %11, %14 : vector<8x8xf32>
    %16 = math.exp %15 : vector<8x8xf32>
    %cst_9 = arith.constant dense<0.000000e+00> : vector<8xf32>
    %17 = vector.multi_reduction <add>, %16, %cst_9 [1] : vector<8x8xf32> to vector<8xf32>
    %18 = vector.shape_cast %17 : vector<8xf32> to vector<8x1xf32>
    %19 = tpu.reciprocal %18 {approx = true} : vector<8x1xf32> -> vector<8x1xf32>
    %20 = vector.broadcast %19 : vector<8x1xf32> to vector<8x8xf32>
    %21 = arith.mulf %16, %20 : vector<8x8xf32>
    %cst_10 = arith.constant dense<0.000000e+00> : vector<8x8xf32>
    %22 = tpu.matmul %21, %10, %cst_10 {dimension_numbers = #tpu.dot_dimension_numbers<[1], [0], [0], [1], [0, 0, 1, 1], [], []>} : vector<8x8xf32>, vector<8x8xf32>, vector<8x8xf32> -> vector<8x8xf32>
    %c0_11 = arith.constant 0 : index
    %c0_12 = arith.constant 0 : index
    %23 = vector.load %arg3[%c0_11, %c0_12] : memref<32x32xf32, #tpu.memory_space<vmem>>, vector<8x32xf32>
    %cst_13 = arith.constant dense<0.000000e+00> : vector<8x32xf32>
    %24 = tpu.matmul %22, %23, %cst_13 {dimension_numbers = #tpu.dot_dimension_numbers<[1], [0], [0], [1], [0, 0, 1, 1], [], []>} : vector<8x8xf32>, vector<8x32xf32>, vector<8x32xf32> -> vector<8x32xf32>
    %25 = arith.addf %7, %24 : vector<8x32xf32>
    %26 = vector.extract_strided_slice %6 {offsets = [0, 8], sizes = [8, 8], strides = [1, 1]} : vector<16x96xf32> to vector<8x8xf32>
    %27 = vector.extract_strided_slice %6 {offsets = [0, 40], sizes = [8, 8], strides = [1, 1]} : vector<16x96xf32> to vector<8x8xf32>
    %28 = vector.extract_strided_slice %6 {offsets = [0, 72], sizes = [8, 8], strides = [1, 1]} : vector<16x96xf32> to vector<8x8xf32>
    %cst_14 = arith.constant dense<0.000000e+00> : vector<8x8xf32>
    %29 = tpu.matmul %26, %27, %cst_14 {dimension_numbers = #tpu.dot_dimension_numbers<[1], [1], [0], [0], [0, 0, 1, 0], [], []>} : vector<8x8xf32>, vector<8x8xf32>, vector<8x8xf32> -> vector<8x8xf32>
    %cst_15 = arith.constant dense<0xFF800000> : vector<8xf32>
    %30 = vector.multi_reduction <maximumf>, %29, %cst_15 [1] : vector<8x8xf32> to vector<8xf32>
    %31 = vector.shape_cast %30 : vector<8xf32> to vector<8x1xf32>
    %32 = vector.broadcast %31 : vector<8x1xf32> to vector<8x8xf32>
    %33 = arith.subf %29, %32 : vector<8x8xf32>
    %34 = math.exp %33 : vector<8x8xf32>
    %cst_16 = arith.constant dense<0.000000e+00> : vector<8xf32>
    %35 = vector.multi_reduction <add>, %34, %cst_16 [1] : vector<8x8xf32> to vector<8xf32>
    %36 = vector.shape_cast %35 : vector<8xf32> to vector<8x1xf32>
    %37 = tpu.reciprocal %36 {approx = true} : vector<8x1xf32> -> vector<8x1xf32>
    %38 = vector.broadcast %37 : vector<8x1xf32> to vector<8x8xf32>
    %39 = arith.mulf %34, %38 : vector<8x8xf32>
    %cst_17 = arith.constant dense<0.000000e+00> : vector<8x8xf32>
    %40 = tpu.matmul %39, %28, %cst_17 {dimension_numbers = #tpu.dot_dimension_numbers<[1], [0], [0], [1], [0, 0, 1, 1], [], []>} : vector<8x8xf32>, vector<8x8xf32>, vector<8x8xf32> -> vector<8x8xf32>
    %c8 = arith.constant 8 : index
    %c0_18 = arith.constant 0 : index
    %41 = vector.load %arg3[%c8, %c0_18] : memref<32x32xf32, #tpu.memory_space<vmem>>, vector<8x32xf32>
    %cst_19 = arith.constant dense<0.000000e+00> : vector<8x32xf32>
    %42 = tpu.matmul %40, %41, %cst_19 {dimension_numbers = #tpu.dot_dimension_numbers<[1], [0], [0], [1], [0, 0, 1, 1], [], []>} : vector<8x8xf32>, vector<8x32xf32>, vector<8x32xf32> -> vector<8x32xf32>
    %43 = arith.addf %25, %42 : vector<8x32xf32>
    %44 = vector.extract_strided_slice %6 {offsets = [0, 16], sizes = [8, 8], strides = [1, 1]} : vector<16x96xf32> to vector<8x8xf32>
    %45 = vector.extract_strided_slice %6 {offsets = [0, 48], sizes = [8, 8], strides = [1, 1]} : vector<16x96xf32> to vector<8x8xf32>
    %46 = vector.extract_strided_slice %6 {offsets = [0, 80], sizes = [8, 8], strides = [1, 1]} : vector<16x96xf32> to vector<8x8xf32>
    %cst_20 = arith.constant dense<0.000000e+00> : vector<8x8xf32>
    %47 = tpu.matmul %44, %45, %cst_20 {dimension_numbers = #tpu.dot_dimension_numbers<[1], [1], [0], [0], [0, 0, 1, 0], [], []>} : vector<8x8xf32>, vector<8x8xf32>, vector<8x8xf32> -> vector<8x8xf32>
    %cst_21 = arith.constant dense<0xFF800000> : vector<8xf32>
    %48 = vector.multi_reduction <maximumf>, %47, %cst_21 [1] : vector<8x8xf32> to vector<8xf32>
    %49 = vector.shape_cast %48 : vector<8xf32> to vector<8x1xf32>
    %50 = vector.broadcast %49 : vector<8x1xf32> to vector<8x8xf32>
    %51 = arith.subf %47, %50 : vector<8x8xf32>
    %52 = math.exp %51 : vector<8x8xf32>
    %cst_22 = arith.constant dense<0.000000e+00> : vector<8xf32>
    %53 = vector.multi_reduction <add>, %52, %cst_22 [1] : vector<8x8xf32> to vector<8xf32>
    %54 = vector.shape_cast %53 : vector<8xf32> to vector<8x1xf32>
    %55 = tpu.reciprocal %54 {approx = true} : vector<8x1xf32> -> vector<8x1xf32>
    %56 = vector.broadcast %55 : vector<8x1xf32> to vector<8x8xf32>
    %57 = arith.mulf %52, %56 : vector<8x8xf32>
    %cst_23 = arith.constant dense<0.000000e+00> : vector<8x8xf32>
    %58 = tpu.matmul %57, %46, %cst_23 {dimension_numbers = #tpu.dot_dimension_numbers<[1], [0], [0], [1], [0, 0, 1, 1], [], []>} : vector<8x8xf32>, vector<8x8xf32>, vector<8x8xf32> -> vector<8x8xf32>
    %c16 = arith.constant 16 : index
    %c0_24 = arith.constant 0 : index
    %59 = vector.load %arg3[%c16, %c0_24] : memref<32x32xf32, #tpu.memory_space<vmem>>, vector<8x32xf32>
    %cst_25 = arith.constant dense<0.000000e+00> : vector<8x32xf32>
    %60 = tpu.matmul %58, %59, %cst_25 {dimension_numbers = #tpu.dot_dimension_numbers<[1], [0], [0], [1], [0, 0, 1, 1], [], []>} : vector<8x8xf32>, vector<8x32xf32>, vector<8x32xf32> -> vector<8x32xf32>
    %61 = arith.addf %43, %60 : vector<8x32xf32>
    %62 = vector.extract_strided_slice %6 {offsets = [0, 24], sizes = [8, 8], strides = [1, 1]} : vector<16x96xf32> to vector<8x8xf32>
    %63 = vector.extract_strided_slice %6 {offsets = [0, 56], sizes = [8, 8], strides = [1, 1]} : vector<16x96xf32> to vector<8x8xf32>
    %64 = vector.extract_strided_slice %6 {offsets = [0, 88], sizes = [8, 8], strides = [1, 1]} : vector<16x96xf32> to vector<8x8xf32>
    %cst_26 = arith.constant dense<0.000000e+00> : vector<8x8xf32>
    %65 = tpu.matmul %62, %63, %cst_26 {dimension_numbers = #tpu.dot_dimension_numbers<[1], [1], [0], [0], [0, 0, 1, 0], [], []>} : vector<8x8xf32>, vector<8x8xf32>, vector<8x8xf32> -> vector<8x8xf32>
    %cst_27 = arith.constant dense<0xFF800000> : vector<8xf32>
    %66 = vector.multi_reduction <maximumf>, %65, %cst_27 [1] : vector<8x8xf32> to vector<8xf32>
    %67 = vector.shape_cast %66 : vector<8xf32> to vector<8x1xf32>
    %68 = vector.broadcast %67 : vector<8x1xf32> to vector<8x8xf32>
    %69 = arith.subf %65, %68 : vector<8x8xf32>
    %70 = math.exp %69 : vector<8x8xf32>
    %cst_28 = arith.constant dense<0.000000e+00> : vector<8xf32>
    %71 = vector.multi_reduction <add>, %70, %cst_28 [1] : vector<8x8xf32> to vector<8xf32>
    %72 = vector.shape_cast %71 : vector<8xf32> to vector<8x1xf32>
    %73 = tpu.reciprocal %72 {approx = true} : vector<8x1xf32> -> vector<8x1xf32>
    %74 = vector.broadcast %73 : vector<8x1xf32> to vector<8x8xf32>
    %75 = arith.mulf %70, %74 : vector<8x8xf32>
    %cst_29 = arith.constant dense<0.000000e+00> : vector<8x8xf32>
    %76 = tpu.matmul %75, %64, %cst_29 {dimension_numbers = #tpu.dot_dimension_numbers<[1], [0], [0], [1], [0, 0, 1, 1], [], []>} : vector<8x8xf32>, vector<8x8xf32>, vector<8x8xf32> -> vector<8x8xf32>
    %c24 = arith.constant 24 : index
    %c0_30 = arith.constant 0 : index
    %77 = vector.load %arg3[%c24, %c0_30] : memref<32x32xf32, #tpu.memory_space<vmem>>, vector<8x32xf32>
    %cst_31 = arith.constant dense<0.000000e+00> : vector<8x32xf32>
    %78 = tpu.matmul %76, %77, %cst_31 {dimension_numbers = #tpu.dot_dimension_numbers<[1], [0], [0], [1], [0, 0, 1, 1], [], []>} : vector<8x8xf32>, vector<8x32xf32>, vector<8x32xf32> -> vector<8x32xf32>
    %79 = arith.addf %61, %78 : vector<8x32xf32>
    %cst_32 = arith.constant 0.000000e+00 : f32
    %80 = vector.broadcast %cst_32 : f32 to vector<8x32xf32>
    %81 = vector.extract_strided_slice %6 {offsets = [8, 0], sizes = [8, 8], strides = [1, 1]} : vector<16x96xf32> to vector<8x8xf32>
    %82 = vector.extract_strided_slice %6 {offsets = [8, 32], sizes = [8, 8], strides = [1, 1]} : vector<16x96xf32> to vector<8x8xf32>
    %83 = vector.extract_strided_slice %6 {offsets = [8, 64], sizes = [8, 8], strides = [1, 1]} : vector<16x96xf32> to vector<8x8xf32>
    %cst_33 = arith.constant dense<0.000000e+00> : vector<8x8xf32>
    %84 = tpu.matmul %81, %82, %cst_33 {dimension_numbers = #tpu.dot_dimension_numbers<[1], [1], [0], [0], [0, 0, 1, 0], [], []>} : vector<8x8xf32>, vector<8x8xf32>, vector<8x8xf32> -> vector<8x8xf32>
    %cst_34 = arith.constant dense<0xFF800000> : vector<8xf32>
    %85 = vector.multi_reduction <maximumf>, %84, %cst_34 [1] : vector<8x8xf32> to vector<8xf32>
    %86 = vector.shape_cast %85 : vector<8xf32> to vector<8x1xf32>
    %87 = vector.broadcast %86 : vector<8x1xf32> to vector<8x8xf32>
    %88 = arith.subf %84, %87 : vector<8x8xf32>
    %89 = math.exp %88 : vector<8x8xf32>
    %cst_35 = arith.constant dense<0.000000e+00> : vector<8xf32>
    %90 = vector.multi_reduction <add>, %89, %cst_35 [1] : vector<8x8xf32> to vector<8xf32>
    %91 = vector.shape_cast %90 : vector<8xf32> to vector<8x1xf32>
    %92 = tpu.reciprocal %91 {approx = true} : vector<8x1xf32> -> vector<8x1xf32>
    %93 = vector.broadcast %92 : vector<8x1xf32> to vector<8x8xf32>
    %94 = arith.mulf %89, %93 : vector<8x8xf32>
    %cst_36 = arith.constant dense<0.000000e+00> : vector<8x8xf32>
    %95 = tpu.matmul %94, %83, %cst_36 {dimension_numbers = #tpu.dot_dimension_numbers<[1], [0], [0], [1], [0, 0, 1, 1], [], []>} : vector<8x8xf32>, vector<8x8xf32>, vector<8x8xf32> -> vector<8x8xf32>
    %c0_37 = arith.constant 0 : index
    %c0_38 = arith.constant 0 : index
    %96 = vector.load %arg3[%c0_37, %c0_38] : memref<32x32xf32, #tpu.memory_space<vmem>>, vector<8x32xf32>
    %cst_39 = arith.constant dense<0.000000e+00> : vector<8x32xf32>
    %97 = tpu.matmul %95, %96, %cst_39 {dimension_numbers = #tpu.dot_dimension_numbers<[1], [0], [0], [1], [0, 0, 1, 1], [], []>} : vector<8x8xf32>, vector<8x32xf32>, vector<8x32xf32> -> vector<8x32xf32>
    %98 = arith.addf %80, %97 : vector<8x32xf32>
    %99 = vector.extract_strided_slice %6 {offsets = [8, 8], sizes = [8, 8], strides = [1, 1]} : vector<16x96xf32> to vector<8x8xf32>
    %100 = vector.extract_strided_slice %6 {offsets = [8, 40], sizes = [8, 8], strides = [1, 1]} : vector<16x96xf32> to vector<8x8xf32>
    %101 = vector.extract_strided_slice %6 {offsets = [8, 72], sizes = [8, 8], strides = [1, 1]} : vector<16x96xf32> to vector<8x8xf32>
    %cst_40 = arith.constant dense<0.000000e+00> : vector<8x8xf32>
    %102 = tpu.matmul %99, %100, %cst_40 {dimension_numbers = #tpu.dot_dimension_numbers<[1], [1], [0], [0], [0, 0, 1, 0], [], []>} : vector<8x8xf32>, vector<8x8xf32>, vector<8x8xf32> -> vector<8x8xf32>
    %cst_41 = arith.constant dense<0xFF800000> : vector<8xf32>
    %103 = vector.multi_reduction <maximumf>, %102, %cst_41 [1] : vector<8x8xf32> to vector<8xf32>
    %104 = vector.shape_cast %103 : vector<8xf32> to vector<8x1xf32>
    %105 = vector.broadcast %104 : vector<8x1xf32> to vector<8x8xf32>
    %106 = arith.subf %102, %105 : vector<8x8xf32>
    %107 = math.exp %106 : vector<8x8xf32>
    %cst_42 = arith.constant dense<0.000000e+00> : vector<8xf32>
    %108 = vector.multi_reduction <add>, %107, %cst_42 [1] : vector<8x8xf32> to vector<8xf32>
    %109 = vector.shape_cast %108 : vector<8xf32> to vector<8x1xf32>
    %110 = tpu.reciprocal %109 {approx = true} : vector<8x1xf32> -> vector<8x1xf32>
    %111 = vector.broadcast %110 : vector<8x1xf32> to vector<8x8xf32>
    %112 = arith.mulf %107, %111 : vector<8x8xf32>
    %cst_43 = arith.constant dense<0.000000e+00> : vector<8x8xf32>
    %113 = tpu.matmul %112, %101, %cst_43 {dimension_numbers = #tpu.dot_dimension_numbers<[1], [0], [0], [1], [0, 0, 1, 1], [], []>} : vector<8x8xf32>, vector<8x8xf32>, vector<8x8xf32> -> vector<8x8xf32>
    %c8_44 = arith.constant 8 : index
    %c0_45 = arith.constant 0 : index
    %114 = vector.load %arg3[%c8_44, %c0_45] : memref<32x32xf32, #tpu.memory_space<vmem>>, vector<8x32xf32>
    %cst_46 = arith.constant dense<0.000000e+00> : vector<8x32xf32>
    %115 = tpu.matmul %113, %114, %cst_46 {dimension_numbers = #tpu.dot_dimension_numbers<[1], [0], [0], [1], [0, 0, 1, 1], [], []>} : vector<8x8xf32>, vector<8x32xf32>, vector<8x32xf32> -> vector<8x32xf32>
    %116 = arith.addf %98, %115 : vector<8x32xf32>
    %117 = vector.extract_strided_slice %6 {offsets = [8, 16], sizes = [8, 8], strides = [1, 1]} : vector<16x96xf32> to vector<8x8xf32>
    %118 = vector.extract_strided_slice %6 {offsets = [8, 48], sizes = [8, 8], strides = [1, 1]} : vector<16x96xf32> to vector<8x8xf32>
    %119 = vector.extract_strided_slice %6 {offsets = [8, 80], sizes = [8, 8], strides = [1, 1]} : vector<16x96xf32> to vector<8x8xf32>
    %cst_47 = arith.constant dense<0.000000e+00> : vector<8x8xf32>
    %120 = tpu.matmul %117, %118, %cst_47 {dimension_numbers = #tpu.dot_dimension_numbers<[1], [1], [0], [0], [0, 0, 1, 0], [], []>} : vector<8x8xf32>, vector<8x8xf32>, vector<8x8xf32> -> vector<8x8xf32>
    %cst_48 = arith.constant dense<0xFF800000> : vector<8xf32>
    %121 = vector.multi_reduction <maximumf>, %120, %cst_48 [1] : vector<8x8xf32> to vector<8xf32>
    %122 = vector.shape_cast %121 : vector<8xf32> to vector<8x1xf32>
    %123 = vector.broadcast %122 : vector<8x1xf32> to vector<8x8xf32>
    %124 = arith.subf %120, %123 : vector<8x8xf32>
    %125 = math.exp %124 : vector<8x8xf32>
    %cst_49 = arith.constant dense<0.000000e+00> : vector<8xf32>
    %126 = vector.multi_reduction <add>, %125, %cst_49 [1] : vector<8x8xf32> to vector<8xf32>
    %127 = vector.shape_cast %126 : vector<8xf32> to vector<8x1xf32>
    %128 = tpu.reciprocal %127 {approx = true} : vector<8x1xf32> -> vector<8x1xf32>
    %129 = vector.broadcast %128 : vector<8x1xf32> to vector<8x8xf32>
    %130 = arith.mulf %125, %129 : vector<8x8xf32>
    %cst_50 = arith.constant dense<0.000000e+00> : vector<8x8xf32>
    %131 = tpu.matmul %130, %119, %cst_50 {dimension_numbers = #tpu.dot_dimension_numbers<[1], [0], [0], [1], [0, 0, 1, 1], [], []>} : vector<8x8xf32>, vector<8x8xf32>, vector<8x8xf32> -> vector<8x8xf32>
    %c16_51 = arith.constant 16 : index
    %c0_52 = arith.constant 0 : index
    %132 = vector.load %arg3[%c16_51, %c0_52] : memref<32x32xf32, #tpu.memory_space<vmem>>, vector<8x32xf32>
    %cst_53 = arith.constant dense<0.000000e+00> : vector<8x32xf32>
    %133 = tpu.matmul %131, %132, %cst_53 {dimension_numbers = #tpu.dot_dimension_numbers<[1], [0], [0], [1], [0, 0, 1, 1], [], []>} : vector<8x8xf32>, vector<8x32xf32>, vector<8x32xf32> -> vector<8x32xf32>
    %134 = arith.addf %116, %133 : vector<8x32xf32>
    %135 = vector.extract_strided_slice %6 {offsets = [8, 24], sizes = [8, 8], strides = [1, 1]} : vector<16x96xf32> to vector<8x8xf32>
    %136 = vector.extract_strided_slice %6 {offsets = [8, 56], sizes = [8, 8], strides = [1, 1]} : vector<16x96xf32> to vector<8x8xf32>
    %137 = vector.extract_strided_slice %6 {offsets = [8, 88], sizes = [8, 8], strides = [1, 1]} : vector<16x96xf32> to vector<8x8xf32>
    %cst_54 = arith.constant dense<0.000000e+00> : vector<8x8xf32>
    %138 = tpu.matmul %135, %136, %cst_54 {dimension_numbers = #tpu.dot_dimension_numbers<[1], [1], [0], [0], [0, 0, 1, 0], [], []>} : vector<8x8xf32>, vector<8x8xf32>, vector<8x8xf32> -> vector<8x8xf32>
    %cst_55 = arith.constant dense<0xFF800000> : vector<8xf32>
    %139 = vector.multi_reduction <maximumf>, %138, %cst_55 [1] : vector<8x8xf32> to vector<8xf32>
    %140 = vector.shape_cast %139 : vector<8xf32> to vector<8x1xf32>
    %141 = vector.broadcast %140 : vector<8x1xf32> to vector<8x8xf32>
    %142 = arith.subf %138, %141 : vector<8x8xf32>
    %143 = math.exp %142 : vector<8x8xf32>
    %cst_56 = arith.constant dense<0.000000e+00> : vector<8xf32>
    %144 = vector.multi_reduction <add>, %143, %cst_56 [1] : vector<8x8xf32> to vector<8xf32>
    %145 = vector.shape_cast %144 : vector<8xf32> to vector<8x1xf32>
    %146 = tpu.reciprocal %145 {approx = true} : vector<8x1xf32> -> vector<8x1xf32>
    %147 = vector.broadcast %146 : vector<8x1xf32> to vector<8x8xf32>
    %148 = arith.mulf %143, %147 : vector<8x8xf32>
    %cst_57 = arith.constant dense<0.000000e+00> : vector<8x8xf32>
    %149 = tpu.matmul %148, %137, %cst_57 {dimension_numbers = #tpu.dot_dimension_numbers<[1], [0], [0], [1], [0, 0, 1, 1], [], []>} : vector<8x8xf32>, vector<8x8xf32>, vector<8x8xf32> -> vector<8x8xf32>
    %c24_58 = arith.constant 24 : index
    %c0_59 = arith.constant 0 : index
    %150 = vector.load %arg3[%c24_58, %c0_59] : memref<32x32xf32, #tpu.memory_space<vmem>>, vector<8x32xf32>
    %cst_60 = arith.constant dense<0.000000e+00> : vector<8x32xf32>
    %151 = tpu.matmul %149, %150, %cst_60 {dimension_numbers = #tpu.dot_dimension_numbers<[1], [0], [0], [1], [0, 0, 1, 1], [], []>} : vector<8x8xf32>, vector<8x32xf32>, vector<8x32xf32> -> vector<8x32xf32>
    %152 = arith.addf %134, %151 : vector<8x32xf32>
    %153 = tpu.concatenate %79, %152 in 0 : vector<8x32xf32>, vector<8x32xf32> -> vector<16x32xf32>
    %c0_61 = arith.constant 0 : index
    %c0_62 = arith.constant 0 : index
    %154 = vector.load %arg4[%c0_61, %c0_62] : memref<3x32xf32, #tpu.memory_space<vmem>>, vector<1x32xf32>
    %155 = vector.broadcast %154 : vector<1x32xf32> to vector<16x32xf32>
    %156 = arith.addf %153, %155 : vector<16x32xf32>
    %157 = arith.addf %1, %156 : vector<16x32xf32>
    %c0_63 = arith.constant 0 : index
    %c0_64 = arith.constant 0 : index
    %158 = vector.load %arg5[%c0_63, %c0_64] : memref<32x32xf32, #tpu.memory_space<vmem>>, vector<32x32xf32>
    %cst_65 = arith.constant dense<0.000000e+00> : vector<16x32xf32>
    %159 = tpu.matmul %157, %158, %cst_65 {dimension_numbers = #tpu.dot_dimension_numbers<[1], [0], [0], [1], [0, 0, 1, 1], [], []>} : vector<16x32xf32>, vector<32x32xf32>, vector<16x32xf32> -> vector<16x32xf32>
    %c1 = arith.constant 1 : index
    %c0_66 = arith.constant 0 : index
    %160 = vector.load %arg4[%c1, %c0_66] : memref<3x32xf32, #tpu.memory_space<vmem>>, vector<1x32xf32>
    %161 = vector.broadcast %160 : vector<1x32xf32> to vector<16x32xf32>
    %162 = arith.addf %159, %161 : vector<16x32xf32>
    %cst_67 = arith.constant 0.000000e+00 : f32
    %163 = vector.broadcast %cst_67 : f32 to vector<16x32xf32>
    %164 = arith.maximumf %162, %163 : vector<16x32xf32>
    %c0_68 = arith.constant 0 : index
    %c0_69 = arith.constant 0 : index
    %165 = vector.load %arg6[%c0_68, %c0_69] : memref<32x32xf32, #tpu.memory_space<vmem>>, vector<32x32xf32>
    %cst_70 = arith.constant dense<0.000000e+00> : vector<16x32xf32>
    %166 = tpu.matmul %164, %165, %cst_70 {dimension_numbers = #tpu.dot_dimension_numbers<[1], [0], [0], [1], [0, 0, 1, 1], [], []>} : vector<16x32xf32>, vector<32x32xf32>, vector<16x32xf32> -> vector<16x32xf32>
    %167 = arith.addf %157, %166 : vector<16x32xf32>
    %c2 = arith.constant 2 : index
    %c0_71 = arith.constant 0 : index
    %168 = vector.load %arg4[%c2, %c0_71] : memref<3x32xf32, #tpu.memory_space<vmem>>, vector<1x32xf32>
    %169 = vector.broadcast %168 : vector<1x32xf32> to vector<16x32xf32>
    %170 = arith.addf %167, %169 : vector<16x32xf32>
    %171 = vector.shape_cast %170 : vector<16x32xf32> to vector<2x8x32xf32>
    %c0_72 = arith.constant 0 : index
    %c0_73 = arith.constant 0 : index
    %c0_74 = arith.constant 0 : index
    %172 = vector.load %arg7[%c0_72, %c0_73, %c0_74] : memref<2x8x32xf32, #tpu.memory_space<vmem>>, vector<2x8x32xf32>
    tpu.vector_store %arg7[%c0_72, %c0_73, %c0_74], %171 {strides = array<i32>} : memref<2x8x32xf32, #tpu.memory_space<vmem>>, vector<2x8x32xf32>,
    return
  }
}

</mosaic_0001>

<llo_original>
// kernel: tpu_custom_call.1
$region0: #{tpu_custom_call.1}
  #allocation0 [shape = 'u32[]', space=smem, size = 0x4, offset = 0x4, fixed_abs, tag = 'smem constant byte address 0x4 - core index']
  #allocation1 [shape = 'u32[72,128]{1,0:T(1,128)}', space=vmem, size = 0x9000, scoped, tag = 'internal scratch']
  %s0 = inlined_call_operand.hbm [shape: f32[2,8,32], index: 0, kind: input, shape index: {}]
  %s1 = inlined_call_operand.hbm [shape: f32[32,96], index: 1, kind: input, shape index: {}]
  %s2 = inlined_call_operand.vmem [shape: f32[1,96], index: 2, kind: input, shape index: {}]
  %s3 = inlined_call_operand.hbm [shape: f32[32,32], index: 3, kind: input, shape index: {}]
  %s4 = inlined_call_operand.hbm [shape: f32[3,32], index: 4, kind: input, shape index: {}]
  %s5 = inlined_call_operand.hbm [shape: f32[32,32], index: 5, kind: input, shape index: {}]
  %s6 = inlined_call_operand.hbm [shape: f32[32,32], index: 6, kind: input, shape index: {}]
  %s7 = inlined_call_operand.hbm [shape: f32[2,8,32], index: 7, kind: output, shape index: {}]
  %s8 = sld [smem:[#allocation0]]
  $region62: #{tpu_custom_call.1} parent=0
    _
  %s10 = ssub.s32 1, %s8
  %s11 = scalar_select 0, %s10, %s8
  $region1: #{tpu_custom_call.1} parent=0
    #allocation2 [shape = 'u8[8192]{0}', space=vmem, size = 0x2000, scoped, tag = 'input window, operand 0, single buffered']
    #allocation3 [shape = 's32[1]{0}', space=sflag, size = 0x4, scoped, tag = 'scoped memory for tpu_custom_call.1']
    #allocation4 [shape = 's32[1]{0}', space=sflag, size = 0x4, scoped, tag = 'scoped memory for tpu_custom_call.1']
    #allocation5 [shape = 'u8[16384]{0}', space=vmem, size = 0x4000, scoped, tag = 'input window, operand 1, single buffered']
    #allocation6 [shape = 's32[1]{0}', space=sflag, size = 0x4, scoped, tag = 'scoped memory for tpu_custom_call.1']
    #allocation7 [shape = 'u8[16384]{0}', space=vmem, size = 0x4000, scoped, tag = 'input window, operand 3, single buffered']
    #allocation8 [shape = 'u8[2048]{0}', space=vmem, size = 0x800, scoped, tag = 'input window, operand 4, single buffered']
    #allocation9 [shape = 's32[1]{0}', space=sflag, size = 0x4, scoped, tag = 'scoped memory for tpu_custom_call.1']
    #allocation10 [shape = 'u8[16384]{0}', space=vmem, size = 0x4000, scoped, tag = 'input window, operand 5, single buffered']
    #allocation11 [shape = 'u8[16384]{0}', space=vmem, size = 0x4000, scoped, tag = 'input window, operand 6, single buffered']
    #allocation12 [shape = 's32[1]{0}', space=sflag, size = 0x4, scoped, tag = 'scoped memory for tpu_custom_call.1']
    #allocation13 [shape = 'u8[8192]{0}', space=vmem, size = 0x2000, scoped, tag = 'output window, operand 0, single buffered']
    %12 = vsyncpa [#allocation3], 0
    %13 = vsyncpa [#allocation6], 0
    %14 = vsyncpa [#allocation9], 0
    %15 = vsyncpa [#allocation12], 0
    %16 = vsyncpa [#allocation4], 0
    // Predicated region
    $region2: #{tpu_custom_call.1} parent=1 // pred_check
      _
    $region3: #{tpu_custom_call.1} parent=1 // pred_check_branch
      %18 = sbr.rel (0) target = $region5
    $region4: #{tpu_custom_call.1} parent=1 // pred_region
      %20 = vsyncadd [#allocation3], 0
      %s21 = sshll.u32 %s0, 4
      %s22 = int_to_ptr.hbm [resolvable:$true] %s21
      %s23 = sshll.u32 [#allocation2], 4
      %s24 = int_to_ptr.vmem [resolvable:$true] %s23
      %29 = dma.hbm_to_vmem [thread:$0]  %s22, 256, %s24, [#allocation3], 128, 128, 8
    $region5: #{tpu_custom_call.1} parent=1 // pred_fallthru
      _
    // Predicated region
    $region6: #{tpu_custom_call.1} parent=1 // pred_check
      _
    $region7: #{tpu_custom_call.1} parent=1 // pred_check_branch
      %31 = sbr.rel (0) target = $region9
    $region8: #{tpu_custom_call.1} parent=1 // pred_region
      %33 = vsyncadd [#allocation6], 0
      %s34 = sshll.u32 %s1, 4
      %s35 = int_to_ptr.hbm [resolvable:$true] %s34
      %s36 = sshll.u32 [#allocation5], 4
      %s37 = int_to_ptr.vmem [resolvable:$true] %s36
      %42 = dma.hbm_to_vmem [thread:$0]  %s35, 512, %s37, [#allocation6], 128, 128, 8
    $region9: #{tpu_custom_call.1} parent=1 // pred_fallthru
      _
    // Predicated region
    $region10: #{tpu_custom_call.1} parent=1 // pred_check
      _
    $region11: #{tpu_custom_call.1} parent=1 // pred_check_branch
      %44 = sbr.rel (0) target = $region13
    $region12: #{tpu_custom_call.1} parent=1 // pred_region
      _
    $region13: #{tpu_custom_call.1} parent=1 // pred_fallthru
      _
    // Predicated region
    $region14: #{tpu_custom_call.1} parent=1 // pred_check
      _
    $region15: #{tpu_custom_call.1} parent=1 // pred_check_branch
      %46 = sbr.rel (0) target = $region17
    $region16: #{tpu_custom_call.1} parent=1 // pred_region
      %48 = vsyncadd [#allocation6], 0
      %s49 = sshll.u32 %s3, 4
      %s50 = int_to_ptr.hbm [resolvable:$true] %s49
      %s51 = sshll.u32 [#allocation7], 4
      %s52 = int_to_ptr.vmem [resolvable:$true] %s51
      %57 = dma.hbm_to_vmem [thread:$0]  %s50, 512, %s52, [#allocation6], 128, 128, 8
    $region17: #{tpu_custom_call.1} parent=1 // pred_fallthru
      _
    // Predicated region
    $region18: #{tpu_custom_call.1} parent=1 // pred_check
      _
    $region19: #{tpu_custom_call.1} parent=1 // pred_check_branch
      %59 = sbr.rel (0) target = $region21
    $region20: #{tpu_custom_call.1} parent=1 // pred_region
      %61 = vsyncadd [#allocation9], 0
      %s63 = sshll.u32 %s4, 4
      %s64 = int_to_ptr.hbm [resolvable:$true] %s63
      %s65 = sshll.u32 [#allocation8], 4
      %s66 = int_to_ptr.vmem [resolvable:$true] %s65
      %68 = dma.hbm_to_vmem [thread:$0]  %s64, 64, %s66, [#allocation9]
    $region21: #{tpu_custom_call.1} parent=1 // pred_fallthru
      _
    // Predicated region
    $region22: #{tpu_custom_call.1} parent=1 // pred_check
      _
    $region23: #{tpu_custom_call.1} parent=1 // pred_check_branch
      %70 = sbr.rel (0) target = $region25
    $region24: #{tpu_custom_call.1} parent=1 // pred_region
      %72 = vsyncadd [#allocation9], 0
      %s73 = sshll.u32 %s5, 4
      %s74 = int_to_ptr.hbm [resolvable:$true] %s73
      %s75 = sshll.u32 [#allocation10], 4
      %s76 = int_to_ptr.vmem [resolvable:$true] %s75
      %81 = dma.hbm_to_vmem [thread:$0]  %s74, 512, %s76, [#allocation9], 128, 128, 8
    $region25: #{tpu_custom_call.1} parent=1 // pred_fallthru
      _
    // Predicated region
    $region26: #{tpu_custom_call.1} parent=1 // pred_check
      _
    $region27: #{tpu_custom_call.1} parent=1 // pred_check_branch
      %83 = sbr.rel (0) target = $region29
    $region28: #{tpu_custom_call.1} parent=1 // pred_region
      %85 = vsyncadd [#allocation12], 0
      %s86 = sshll.u32 %s6, 4
      %s87 = int_to_ptr.hbm [resolvable:$true] %s86
      %s88 = sshll.u32 [#allocation11], 4
      %s89 = int_to_ptr.vmem [resolvable:$true] %s88
      %94 = dma.hbm_to_vmem [thread:$0]  %s87, 512, %s89, [#allocation12], 128, 128, 8
    $region29: #{tpu_custom_call.1} parent=1 // pred_fallthru
      _
    // Predicated region
    $region30: #{tpu_custom_call.1} parent=1 // pred_check
      _
    $region31: #{tpu_custom_call.1} parent=1 // pred_check_branch
      %96 = sbr.rel (0) target = $region33
    $region32: #{tpu_custom_call.1} parent=1 // pred_region
      %98 = dma.done [#allocation3], 256
    $region33: #{tpu_custom_call.1} parent=1 // pred_fallthru
      _
    // Predicated region
    $region34: #{tpu_custom_call.1} parent=1 // pred_check
      _
    $region35: #{tpu_custom_call.1} parent=1 // pred_check_branch
      %100 = sbr.rel (0) target = $region37
    $region36: #{tpu_custom_call.1} parent=1 // pred_region
      %102 = dma.done [#allocation6], 512
    $region37: #{tpu_custom_call.1} parent=1 // pred_fallthru
      _
    // Predicated region
    $region38: #{tpu_custom_call.1} parent=1 // pred_check
      _
    $region39: #{tpu_custom_call.1} parent=1 // pred_check_branch
      %104 = sbr.rel (0) target = $region41
    $region40: #{tpu_custom_call.1} parent=1 // pred_region
      %106 = dma.done [#allocation6], 512
    $region41: #{tpu_custom_call.1} parent=1 // pred_fallthru
      _
    // Predicated region
    $region42: #{tpu_custom_call.1} parent=1 // pred_check
      _
    $region43: #{tpu_custom_call.1} parent=1 // pred_check_branch
      %108 = sbr.rel (0) target = $region45
    $region44: #{tpu_custom_call.1} parent=1 // pred_region
      %110 = dma.done [#allocation9], 64
    $region45: #{tpu_custom_call.1} parent=1 // pred_fallthru
      _
    // Predicated region
    $region46: #{tpu_custom_call.1} parent=1 // pred_check
      _
    $region47: #{tpu_custom_call.1} parent=1 // pred_check_branch
      %112 = sbr.rel (0) target = $region49
    $region48: #{tpu_custom_call.1} parent=1 // pred_region
      %114 = dma.done [#allocation9], 512
    $region49: #{tpu_custom_call.1} parent=1 // pred_fallthru
      _
    // Predicated region
    $region50: #{tpu_custom_call.1} parent=1 // pred_check
      _
    $region51: #{tpu_custom_call.1} parent=1 // pred_check_branch
      %116 = sbr.rel (0) target = $region53
    $region52: #{tpu_custom_call.1} parent=1 // pred_region
      %118 = dma.done [#allocation12], 512
    $region53: #{tpu_custom_call.1} parent=1 // pred_fallthru
      _
    %v119 = vld [vmem:[#allocation2] sm:$0xff]
    %v120 = vld [vmem:[#allocation2 + $0x8] sm:$0xff]
    %v121 = vld [vmem:[#allocation5] sm:$0xff]
    %v122 = vld [vmem:[#allocation5 + $0x8] sm:$0xff]
    %v123 = vld [vmem:[#allocation5 + $0x10] sm:$0xff]
    %v124 = vld [vmem:[#allocation5 + $0x18] sm:$0xff]
    %v125 = vld [vmem:[%s2] sm:$0x1]
    %v127 = vperm.slane %v125, 0
    %vm129 = vcmask 261120
    %v131 = vsel %vm129, %v119, 0
    %v134 = vsel %vm129, %v120, 0
    %136 = vmatpush.msra.mxu0 0.0
    %137 = vmatpush.msra.mxu0 0.0
    %138 = vmatpush.msra.mxu0 0.0
    %139 = vmatpush.msra.mxu0 0.0
    %140 = vmatpush.msra.mxu0 0.0
    %141 = vmatpush.msra.mxu0 0.0
    %142 = vmatpush.msra.mxu0 0.0
    %143 = vmatpush.msra.mxu0 0.0
    %144 = vmatpush.msra.mxu0 0.0
    %145 = vmatpush.msra.mxu0 0.0
    %146 = vmatpush.msra.mxu0 0.0
    %147 = vmatpush.msra.mxu0 0.0
    %148 = vmatpush.msra.mxu0 %v124
    %149 = vmatpush.msra.mxu0 %v123
    %150 = vmatpush.msra.mxu0 %v122
    %151 = vmatpush.msra.mxu0 %v121
    %152 = vmatmul.f32.gmra.mxu0 %v131
    %v153 = vpop.f32.mrf.mxu0
    %v154 = vadd.f32 %v127, %v153
    %155 = vmatmul.f32.gmra.mxu0 %v134
    %v156 = vpop.f32.mrf.mxu0
    %v157 = vadd.f32 %v127, %v156
    %158 = vdwg.mxu0
    %160 = vrot.lane.b32.xlu0 %v154, 96
    %v161 = vpop.permute.xlu0 %160
    %vm162 = vcmask 64512
    %v163 = vsel %vm162, %v154, 0
    %v165 = vsel %vm162, %v161, 0
    %167 = vmatpush.xpose.msra.mxu0 0.0
    %168 = vmatpush.xpose.msra.mxu0 0.0
    %169 = vmatpush.xpose.msra.mxu0 0.0
    %170 = vmatpush.xpose.msra.mxu0 0.0
    %171 = vmatpush.xpose.msra.mxu0 0.0
    %172 = vmatpush.xpose.msra.mxu0 0.0
    %173 = vmatpush.xpose.msra.mxu0 0.0
    %174 = vmatpush.xpose.msra.mxu0 0.0
    %175 = vmatpush.xpose.msra.mxu0 0.0
    %176 = vmatpush.xpose.msra.mxu0 0.0
    %177 = vmatpush.xpose.msra.mxu0 0.0
    %178 = vmatpush.xpose.msra.mxu0 0.0
    %179 = vmatpush.xpose.msra.mxu0 0.0
    %180 = vmatpush.xpose.msra.mxu0 0.0
    %181 = vmatpush.xpose.msra.mxu0 0.0
    %182 = vmatpush.xpose.msra.mxu0 %v165
    %183 = vmatmul.f32.gmra.mxu0 %v163
    %v184 = vpop.f32.mrf.mxu0
    %v185 = vadd.f32 0.0, %v184
    %186 = vdwg.mxu0
    %v187 = vsel %vm162, %v185, -inf
    %188 = vmax.xlane.f32.xlu0 %v187
    %v189 = vpop.xlane.xlu0 %188
    %v190 = vsub.f32 %v185, %v189
    %v191 = vmul.f32 %v190, 1.442695
    %v192 = vpow.pop %v191
    %v193 = vsel %vm162, %v192, 0.0
    %194 = vadd.xlane.f32.xlu0 %v193
    %v195 = vpop.xlane.xlu0 %194
    %v196 = vrcp.pop %v195
    %v197 = vmul.f32 %v192, %v196
    %198 = vrot.lane.b32.xlu0 %v154, 64
    %v199 = vpop.permute.xlu0 %198
    %v202 = vsel %vm162, %v197, 0
    %204 = vmatpush.msra.mxu0 0.0
    %205 = vmatpush.msra.mxu0 0.0
    %206 = vmatpush.msra.mxu0 0.0
    %207 = vmatpush.msra.mxu0 0.0
    %208 = vmatpush.msra.mxu0 0.0
    %209 = vmatpush.msra.mxu0 0.0
    %210 = vmatpush.msra.mxu0 0.0
    %211 = vmatpush.msra.mxu0 0.0
    %212 = vmatpush.msra.mxu0 0.0
    %213 = vmatpush.msra.mxu0 0.0
    %214 = vmatpush.msra.mxu0 0.0
    %215 = vmatpush.msra.mxu0 0.0
    %216 = vmatpush.msra.mxu0 0.0
    %217 = vmatpush.msra.mxu0 0.0
    %218 = vmatpush.msra.mxu0 0.0
    %219 = vmatpush.msra.mxu0 %v199
    %220 = vmatmul.f32.gmra.mxu0 %v202
    %v221 = vpop.f32.mrf.mxu0
    %v222 = vadd.f32 0.0, %v221
    %223 = vdwg.mxu0
    %v224 = vld [vmem:[#allocation7] sm:$0xff]
    %225 = vrot.lane.b32.xlu0 %v154, 120
    %v226 = vpop.permute.xlu0 %225
    %227 = vrot.lane.b32.xlu0 %v154, 88
    %v228 = vpop.permute.xlu0 %227
    %v229 = vsel %vm162, %v226, 0
    %v231 = vsel %vm162, %v228, 0
    %233 = vmatpush.xpose.msra.mxu0 0.0
    %234 = vmatpush.xpose.msra.mxu0 0.0
    %235 = vmatpush.xpose.msra.mxu0 0.0
    %236 = vmatpush.xpose.msra.mxu0 0.0
    %237 = vmatpush.xpose.msra.mxu0 0.0
    %238 = vmatpush.xpose.msra.mxu0 0.0
    %239 = vmatpush.xpose.msra.mxu0 0.0
    %240 = vmatpush.xpose.msra.mxu0 0.0
    %241 = vmatpush.xpose.msra.mxu0 0.0
    %242 = vmatpush.xpose.msra.mxu0 0.0
    %243 = vmatpush.xpose.msra.mxu0 0.0
    %244 = vmatpush.xpose.msra.mxu0 0.0
    %245 = vmatpush.xpose.msra.mxu0 0.0
    %246 = vmatpush.xpose.msra.mxu0 0.0
    %247 = vmatpush.xpose.msra.mxu0 0.0
    %248 = vmatpush.xpose.msra.mxu0 %v231
    %249 = vmatmul.f32.gmra.mxu0 %v229
    %v250 = vpop.f32.mrf.mxu0
    %v251 = vadd.f32 0.0, %v250
    %252 = vdwg.mxu0
    %v253 = vsel %vm162, %v251, -inf
    %254 = vmax.xlane.f32.xlu0 %v253
    %v255 = vpop.xlane.xlu0 %254
    %v256 = vsub.f32 %v251, %v255
    %v257 = vmul.f32 %v256, 1.442695
    %v258 = vpow.pop %v257
    %v259 = vsel %vm162, %v258, 0.0
    %260 = vadd.xlane.f32.xlu0 %v259
    %v261 = vpop.xlane.xlu0 %260
    %v262 = vrcp.pop %v261
    %v263 = vmul.f32 %v258, %v262
    %264 = vrot.lane.b32.xlu0 %v154, 56
    %v265 = vpop.permute.xlu0 %264
    %v268 = vsel %vm162, %v263, 0
    %270 = vmatpush.msra.mxu0 0.0
    %271 = vmatpush.msra.mxu0 0.0
    %272 = vmatpush.msra.mxu0 0.0
    %273 = vmatpush.msra.mxu0 0.0
    %274 = vmatpush.msra.mxu0 0.0
    %275 = vmatpush.msra.mxu0 0.0
    %276 = vmatpush.msra.mxu0 0.0
    %277 = vmatpush.msra.mxu0 0.0
    %278 = vmatpush.msra.mxu0 0.0
    %279 = vmatpush.msra.mxu0 0.0
    %280 = vmatpush.msra.mxu0 0.0
    %281 = vmatpush.msra.mxu0 0.0
    %282 = vmatpush.msra.mxu0 0.0
    %283 = vmatpush.msra.mxu0 0.0
    %284 = vmatpush.msra.mxu0 0.0
    %285 = vmatpush.msra.mxu0 %v265
    %286 = vmatmul.f32.gmra.mxu0 %v268
    %v287 = vpop.f32.mrf.mxu0
    %v288 = vadd.f32 0.0, %v287
    %289 = vdwg.mxu0
    %v290 = vld [vmem:[#allocation7 + $0x8] sm:$0xff]
    %v292 = vsel %vm162, %v288, 0
    %294 = vmatpush.msra.mxu0 0.0
    %295 = vmatpush.msra.mxu0 0.0
    %296 = vmatpush.msra.mxu0 0.0
    %297 = vmatpush.msra.mxu0 0.0
    %298 = vmatpush.msra.mxu0 0.0
    %299 = vmatpush.msra.mxu0 0.0
    %300 = vmatpush.msra.mxu0 0.0
    %301 = vmatpush.msra.mxu0 0.0
    %302 = vmatpush.msra.mxu0 0.0
    %303 = vmatpush.msra.mxu0 0.0
    %304 = vmatpush.msra.mxu0 0.0
    %305 = vmatpush.msra.mxu0 0.0
    %306 = vmatpush.msra.mxu0 0.0
    %307 = vmatpush.msra.mxu0 0.0
    %308 = vmatpush.msra.mxu0 0.0
    %309 = vmatpush.msra.mxu0 %v290
    %310 = vmatmul.f32.gmra.mxu0 %v292
    %v311 = vpop.f32.mrf.mxu0
    %v312 = vadd.f32 0.0, %v311
    %313 = vdwg.mxu0
    %v315 = vsel %vm162, %v222, 0
    %317 = vmatpush.msra.mxu0 0.0
    %318 = vmatpush.msra.mxu0 0.0
    %319 = vmatpush.msra.mxu0 0.0
    %320 = vmatpush.msra.mxu0 0.0
    %321 = vmatpush.msra.mxu0 0.0
    %322 = vmatpush.msra.mxu0 0.0
    %323 = vmatpush.msra.mxu0 0.0
    %324 = vmatpush.msra.mxu0 0.0
    %325 = vmatpush.msra.mxu0 0.0
    %326 = vmatpush.msra.mxu0 0.0
    %327 = vmatpush.msra.mxu0 0.0
    %328 = vmatpush.msra.mxu0 0.0
    %329 = vmatpush.msra.mxu0 0.0
    %330 = vmatpush.msra.mxu0 0.0
    %331 = vmatpush.msra.mxu0 0.0
    %332 = vmatpush.msra.mxu0 %v224
    %333 = vmatmul.f32.gmra.mxu0 %v315
    %v334 = vpop.f32.mrf.mxu0
    %v335 = vadd.f32 %v312, %v334
    %336 = vdwg.mxu0
    %337 = vrot.lane.b32.xlu0 %v154, 112
    %v338 = vpop.permute.xlu0 %337
    %339 = vrot.lane.b32.xlu0 %v154, 80
    %v340 = vpop.permute.xlu0 %339
    %v341 = vsel %vm162, %v338, 0
    %v343 = vsel %vm162, %v340, 0
    %345 = vmatpush.xpose.msra.mxu0 0.0
    %346 = vmatpush.xpose.msra.mxu0 0.0
    %347 = vmatpush.xpose.msra.mxu0 0.0
    %348 = vmatpush.xpose.msra.mxu0 0.0
    %349 = vmatpush.xpose.msra.mxu0 0.0
    %350 = vmatpush.xpose.msra.mxu0 0.0
    %351 = vmatpush.xpose.msra.mxu0 0.0
    %352 = vmatpush.xpose.msra.mxu0 0.0
    %353 = vmatpush.xpose.msra.mxu0 0.0
    %354 = vmatpush.xpose.msra.mxu0 0.0
    %355 = vmatpush.xpose.msra.mxu0 0.0
    %356 = vmatpush.xpose.msra.mxu0 0.0
    %357 = vmatpush.xpose.msra.mxu0 0.0
    %358 = vmatpush.xpose.msra.mxu0 0.0
    %359 = vmatpush.xpose.msra.mxu0 0.0
    %360 = vmatpush.xpose.msra.mxu0 %v343
    %361 = vmatmul.f32.gmra.mxu0 %v341
    %v362 = vpop.f32.mrf.mxu0
    %v363 = vadd.f32 0.0, %v362
    %364 = vdwg.mxu0
    %v365 = vsel %vm162, %v363, -inf
    %366 = vmax.xlane.f32.xlu0 %v365
    %v367 = vpop.xlane.xlu0 %366
    %v368 = vsub.f32 %v363, %v367
    %v369 = vmul.f32 %v368, 1.442695
    %v370 = vpow.pop %v369
    %v371 = vsel %vm162, %v370, 0.0
    %372 = vadd.xlane.f32.xlu0 %v371
    %v373 = vpop.xlane.xlu0 %372
    %v374 = vrcp.pop %v373
    %v375 = vmul.f32 %v370, %v374
    %376 = vrot.lane.b32.xlu0 %v154, 48
    %v377 = vpop.permute.xlu0 %376
    %v380 = vsel %vm162, %v375, 0
    %382 = vmatpush.msra.mxu0 0.0
    %383 = vmatpush.msra.mxu0 0.0
    %384 = vmatpush.msra.mxu0 0.0
    %385 = vmatpush.msra.mxu0 0.0
    %386 = vmatpush.msra.mxu0 0.0
    %387 = vmatpush.msra.mxu0 0.0
    %388 = vmatpush.msra.mxu0 0.0
    %389 = vmatpush.msra.mxu0 0.0
    %390 = vmatpush.msra.mxu0 0.0
    %391 = vmatpush.msra.mxu0 0.0
    %392 = vmatpush.msra.mxu0 0.0
    %393 = vmatpush.msra.mxu0 0.0
    %394 = vmatpush.msra.mxu0 0.0
    %395 = vmatpush.msra.mxu0 0.0
    %396 = vmatpush.msra.mxu0 0.0
    %397 = vmatpush.msra.mxu0 %v377
    %398 = vmatmul.f32.gmra.mxu0 %v380
    %v399 = vpop.f32.mrf.mxu0
    %v400 = vadd.f32 0.0, %v399
    %401 = vdwg.mxu0
    %v402 = vld [vmem:[#allocation7 + $0x10] sm:$0xff]
    %v404 = vsel %vm162, %v400, 0
    %406 = vmatpush.msra.mxu0 0.0
    %407 = vmatpush.msra.mxu0 0.0
    %408 = vmatpush.msra.mxu0 0.0
    %409 = vmatpush.msra.mxu0 0.0
    %410 = vmatpush.msra.mxu0 0.0
    %411 = vmatpush.msra.mxu0 0.0
    %412 = vmatpush.msra.mxu0 0.0
    %413 = vmatpush.msra.mxu0 0.0
    %414 = vmatpush.msra.mxu0 0.0
    %415 = vmatpush.msra.mxu0 0.0
    %416 = vmatpush.msra.mxu0 0.0
    %417 = vmatpush.msra.mxu0 0.0
    %418 = vmatpush.msra.mxu0 0.0
    %419 = vmatpush.msra.mxu0 0.0
    %420 = vmatpush.msra.mxu0 0.0
    %421 = vmatpush.msra.mxu0 %v402
    %422 = vmatmul.f32.gmra.mxu0 %v404
    %v423 = vpop.f32.mrf.mxu0
    %v424 = vadd.f32 0.0, %v423
    %425 = vdwg.mxu0
    %v426 = vadd.f32 %v335, %v424
    %427 = vrot.lane.b32.xlu0 %v154, 104
    %v428 = vpop.permute.xlu0 %427
    %429 = vrot.lane.b32.xlu0 %v154, 72
    %v430 = vpop.permute.xlu0 %429
    %v431 = vsel %vm162, %v428, 0
    %v433 = vsel %vm162, %v430, 0
    %435 = vmatpush.xpose.msra.mxu0 0.0
    %436 = vmatpush.xpose.msra.mxu0 0.0
    %437 = vmatpush.xpose.msra.mxu0 0.0
    %438 = vmatpush.xpose.msra.mxu0 0.0
    %439 = vmatpush.xpose.msra.mxu0 0.0
    %440 = vmatpush.xpose.msra.mxu0 0.0
    %441 = vmatpush.xpose.msra.mxu0 0.0
    %442 = vmatpush.xpose.msra.mxu0 0.0
    %443 = vmatpush.xpose.msra.mxu0 0.0
    %444 = vmatpush.xpose.msra.mxu0 0.0
    %445 = vmatpush.xpose.msra.mxu0 0.0
    %446 = vmatpush.xpose.msra.mxu0 0.0
    %447 = vmatpush.xpose.msra.mxu0 0.0
    %448 = vmatpush.xpose.msra.mxu0 0.0
    %449 = vmatpush.xpose.msra.mxu0 0.0
    %450 = vmatpush.xpose.msra.mxu0 %v433
    %451 = vmatmul.f32.gmra.mxu0 %v431
    %v452 = vpop.f32.mrf.mxu0
    %v453 = vadd.f32 0.0, %v452
    %454 = vdwg.mxu0
    %v455 = vsel %vm162, %v453, -inf
    %456 = vmax.xlane.f32.xlu0 %v455
    %v457 = vpop.xlane.xlu0 %456
    %v458 = vsub.f32 %v453, %v457
    %v459 = vmul.f32 %v458, 1.442695
    %v460 = vpow.pop %v459
    %v461 = vsel %vm162, %v460, 0.0
    %462 = vadd.xlane.f32.xlu0 %v461
    %v463 = vpop.xlane.xlu0 %462
    %v464 = vrcp.pop %v463
    %v465 = vmul.f32 %v460, %v464
    %466 = vrot.lane.b32.xlu0 %v154, 40
    %v467 = vpop.permute.xlu0 %466
    %v470 = vsel %vm162, %v465, 0
    %472 = vmatpush.msra.mxu0 0.0
    %473 = vmatpush.msra.mxu0 0.0
    %474 = vmatpush.msra.mxu0 0.0
    %475 = vmatpush.msra.mxu0 0.0
    %476 = vmatpush.msra.mxu0 0.0
    %477 = vmatpush.msra.mxu0 0.0
    %478 = vmatpush.msra.mxu0 0.0
    %479 = vmatpush.msra.mxu0 0.0
    %480 = vmatpush.msra.mxu0 0.0
    %481 = vmatpush.msra.mxu0 0.0
    %482 = vmatpush.msra.mxu0 0.0
    %483 = vmatpush.msra.mxu0 0.0
    %484 = vmatpush.msra.mxu0 0.0
    %485 = vmatpush.msra.mxu0 0.0
    %486 = vmatpush.msra.mxu0 0.0
    %487 = vmatpush.msra.mxu0 %v467
    %488 = vmatmul.f32.gmra.mxu0 %v470
    %v489 = vpop.f32.mrf.mxu0
    %v490 = vadd.f32 0.0, %v489
    %491 = vdwg.mxu0
    %v492 = vld [vmem:[#allocation7 + $0x18] sm:$0xff]
    %v494 = vsel %vm162, %v490, 0
    %496 = vmatpush.msra.mxu0 0.0
    %497 = vmatpush.msra.mxu0 0.0
    %498 = vmatpush.msra.mxu0 0.0
    %499 = vmatpush.msra.mxu0 0.0
    %500 = vmatpush.msra.mxu0 0.0
    %501 = vmatpush.msra.mxu0 0.0
    %502 = vmatpush.msra.mxu0 0.0
    %503 = vmatpush.msra.mxu0 0.0
    %504 = vmatpush.msra.mxu0 0.0
    %505 = vmatpush.msra.mxu0 0.0
    %506 = vmatpush.msra.mxu0 0.0
    %507 = vmatpush.msra.mxu0 0.0
    %508 = vmatpush.msra.mxu0 0.0
    %509 = vmatpush.msra.mxu0 0.0
    %510 = vmatpush.msra.mxu0 0.0
    %511 = vmatpush.msra.mxu0 %v492
    %512 = vmatmul.f32.gmra.mxu0 %v494
    %v513 = vpop.f32.mrf.mxu0
    %v514 = vadd.f32 0.0, %v513
    %515 = vdwg.mxu0
    %v516 = vadd.f32 %v426, %v514
    %518 = vrot.lane.b32.xlu0 %v157, 96
    %v519 = vpop.permute.xlu0 %518
    %v520 = vsel %vm162, %v157, 0
    %v522 = vsel %vm162, %v519, 0
    %524 = vmatpush.xpose.msra.mxu0 0.0
    %525 = vmatpush.xpose.msra.mxu0 0.0
    %526 = vmatpush.xpose.msra.mxu0 0.0
    %527 = vmatpush.xpose.msra.mxu0 0.0
    %528 = vmatpush.xpose.msra.mxu0 0.0
    %529 = vmatpush.xpose.msra.mxu0 0.0
    %530 = vmatpush.xpose.msra.mxu0 0.0
    %531 = vmatpush.xpose.msra.mxu0 0.0
    %532 = vmatpush.xpose.msra.mxu0 0.0
    %533 = vmatpush.xpose.msra.mxu0 0.0
    %534 = vmatpush.xpose.msra.mxu0 0.0
    %535 = vmatpush.xpose.msra.mxu0 0.0
    %536 = vmatpush.xpose.msra.mxu0 0.0
    %537 = vmatpush.xpose.msra.mxu0 0.0
    %538 = vmatpush.xpose.msra.mxu0 0.0
    %539 = vmatpush.xpose.msra.mxu0 %v522
    %540 = vmatmul.f32.gmra.mxu0 %v520
    %v541 = vpop.f32.mrf.mxu0
    %v542 = vadd.f32 0.0, %v541
    %543 = vdwg.mxu0
    %v544 = vsel %vm162, %v542, -inf
    %545 = vmax.xlane.f32.xlu0 %v544
    %v546 = vpop.xlane.xlu0 %545
    %v547 = vsub.f32 %v542, %v546
    %v548 = vmul.f32 %v547, 1.442695
    %v549 = vpow.pop %v548
    %v550 = vsel %vm162, %v549, 0.0
    %551 = vadd.xlane.f32.xlu0 %v550
    %v552 = vpop.xlane.xlu0 %551
    %v553 = vrcp.pop %v552
    %v554 = vmul.f32 %v549, %v553
    %555 = vrot.lane.b32.xlu0 %v157, 64
    %v556 = vpop.permute.xlu0 %555
    %v559 = vsel %vm162, %v554, 0
    %561 = vmatpush.msra.mxu0 0.0
    %562 = vmatpush.msra.mxu0 0.0
    %563 = vmatpush.msra.mxu0 0.0
    %564 = vmatpush.msra.mxu0 0.0
    %565 = vmatpush.msra.mxu0 0.0
    %566 = vmatpush.msra.mxu0 0.0
    %567 = vmatpush.msra.mxu0 0.0
    %568 = vmatpush.msra.mxu0 0.0
    %569 = vmatpush.msra.mxu0 0.0
    %570 = vmatpush.msra.mxu0 0.0
    %571 = vmatpush.msra.mxu0 0.0
    %572 = vmatpush.msra.mxu0 0.0
    %573 = vmatpush.msra.mxu0 0.0
    %574 = vmatpush.msra.mxu0 0.0
    %575 = vmatpush.msra.mxu0 0.0
    %576 = vmatpush.msra.mxu0 %v556
    %577 = vmatmul.f32.gmra.mxu0 %v559
    %v578 = vpop.f32.mrf.mxu0
    %v579 = vadd.f32 0.0, %v578
    %580 = vdwg.mxu0
    %581 = vrot.lane.b32.xlu0 %v157, 120
    %v582 = vpop.permute.xlu0 %581
    %583 = vrot.lane.b32.xlu0 %v157, 88
    %v584 = vpop.permute.xlu0 %583
    %v585 = vsel %vm162, %v582, 0
    %v587 = vsel %vm162, %v584, 0
    %589 = vmatpush.xpose.msra.mxu0 0.0
    %590 = vmatpush.xpose.msra.mxu0 0.0
    %591 = vmatpush.xpose.msra.mxu0 0.0
    %592 = vmatpush.xpose.msra.mxu0 0.0
    %593 = vmatpush.xpose.msra.mxu0 0.0
    %594 = vmatpush.xpose.msra.mxu0 0.0
    %595 = vmatpush.xpose.msra.mxu0 0.0
    %596 = vmatpush.xpose.msra.mxu0 0.0
    %597 = vmatpush.xpose.msra.mxu0 0.0
    %598 = vmatpush.xpose.msra.mxu0 0.0
    %599 = vmatpush.xpose.msra.mxu0 0.0
    %600 = vmatpush.xpose.msra.mxu0 0.0
    %601 = vmatpush.xpose.msra.mxu0 0.0
    %602 = vmatpush.xpose.msra.mxu0 0.0
    %603 = vmatpush.xpose.msra.mxu0 0.0
    %604 = vmatpush.xpose.msra.mxu0 %v587
    %605 = vmatmul.f32.gmra.mxu0 %v585
    %v606 = vpop.f32.mrf.mxu0
    %v607 = vadd.f32 0.0, %v606
    %608 = vdwg.mxu0
    %v609 = vsel %vm162, %v607, -inf
    %610 = vmax.xlane.f32.xlu0 %v609
    %v611 = vpop.xlane.xlu0 %610
    %v612 = vsub.f32 %v607, %v611
    %v613 = vmul.f32 %v612, 1.442695
    %v614 = vpow.pop %v613
    %v615 = vsel %vm162, %v614, 0.0
    %616 = vadd.xlane.f32.xlu0 %v615
    %v617 = vpop.xlane.xlu0 %616
    %v618 = vrcp.pop %v617
    %v619 = vmul.f32 %v614, %v618
    %620 = vrot.lane.b32.xlu0 %v157, 56
    %v621 = vpop.permute.xlu0 %620
    %v624 = vsel %vm162, %v619, 0
    %626 = vmatpush.msra.mxu0 0.0
    %627 = vmatpush.msra.mxu0 0.0
    %628 = vmatpush.msra.mxu0 0.0
    %629 = vmatpush.msra.mxu0 0.0
    %630 = vmatpush.msra.mxu0 0.0
    %631 = vmatpush.msra.mxu0 0.0
    %632 = vmatpush.msra.mxu0 0.0
    %633 = vmatpush.msra.mxu0 0.0
    %634 = vmatpush.msra.mxu0 0.0
    %635 = vmatpush.msra.mxu0 0.0
    %636 = vmatpush.msra.mxu0 0.0
    %637 = vmatpush.msra.mxu0 0.0
    %638 = vmatpush.msra.mxu0 0.0
    %639 = vmatpush.msra.mxu0 0.0
    %640 = vmatpush.msra.mxu0 0.0
    %641 = vmatpush.msra.mxu0 %v621
    %642 = vmatmul.f32.gmra.mxu0 %v624
    %v643 = vpop.f32.mrf.mxu0
    %v644 = vadd.f32 0.0, %v643
    %645 = vdwg.mxu0
    %v647 = vsel %vm162, %v644, 0
    %649 = vmatpush.msra.mxu0 0.0
    %650 = vmatpush.msra.mxu0 0.0
    %651 = vmatpush.msra.mxu0 0.0
    %652 = vmatpush.msra.mxu0 0.0
    %653 = vmatpush.msra.mxu0 0.0
    %654 = vmatpush.msra.mxu0 0.0
    %655 = vmatpush.msra.mxu0 0.0
    %656 = vmatpush.msra.mxu0 0.0
    %657 = vmatpush.msra.mxu0 0.0
    %658 = vmatpush.msra.mxu0 0.0
    %659 = vmatpush.msra.mxu0 0.0
    %660 = vmatpush.msra.mxu0 0.0
    %661 = vmatpush.msra.mxu0 0.0
    %662 = vmatpush.msra.mxu0 0.0
    %663 = vmatpush.msra.mxu0 0.0
    %664 = vmatpush.msra.mxu0 %v290
    %665 = vmatmul.f32.gmra.mxu0 %v647
    %v666 = vpop.f32.mrf.mxu0
    %v667 = vadd.f32 0.0, %v666
    %668 = vdwg.mxu0
    %v670 = vsel %vm162, %v579, 0
    %672 = vmatpush.msra.mxu0 0.0
    %673 = vmatpush.msra.mxu0 0.0
    %674 = vmatpush.msra.mxu0 0.0
    %675 = vmatpush.msra.mxu0 0.0
    %676 = vmatpush.msra.mxu0 0.0
    %677 = vmatpush.msra.mxu0 0.0
    %678 = vmatpush.msra.mxu0 0.0
    %679 = vmatpush.msra.mxu0 0.0
    %680 = vmatpush.msra.mxu0 0.0
    %681 = vmatpush.msra.mxu0 0.0
    %682 = vmatpush.msra.mxu0 0.0
    %683 = vmatpush.msra.mxu0 0.0
    %684 = vmatpush.msra.mxu0 0.0
    %685 = vmatpush.msra.mxu0 0.0
    %686 = vmatpush.msra.mxu0 0.0
    %687 = vmatpush.msra.mxu0 %v224
    %688 = vmatmul.f32.gmra.mxu0 %v670
    %v689 = vpop.f32.mrf.mxu0
    %v690 = vadd.f32 %v667, %v689
    %691 = vdwg.mxu0
    %692 = vrot.lane.b32.xlu0 %v157, 112
    %v693 = vpop.permute.xlu0 %692
    %694 = vrot.lane.b32.xlu0 %v157, 80
    %v695 = vpop.permute.xlu0 %694
    %v696 = vsel %vm162, %v693, 0
    %v698 = vsel %vm162, %v695, 0
    %700 = vmatpush.xpose.msra.mxu0 0.0
    %701 = vmatpush.xpose.msra.mxu0 0.0
    %702 = vmatpush.xpose.msra.mxu0 0.0
    %703 = vmatpush.xpose.msra.mxu0 0.0
    %704 = vmatpush.xpose.msra.mxu0 0.0
    %705 = vmatpush.xpose.msra.mxu0 0.0
    %706 = vmatpush.xpose.msra.mxu0 0.0
    %707 = vmatpush.xpose.msra.mxu0 0.0
    %708 = vmatpush.xpose.msra.mxu0 0.0
    %709 = vmatpush.xpose.msra.mxu0 0.0
    %710 = vmatpush.xpose.msra.mxu0 0.0
    %711 = vmatpush.xpose.msra.mxu0 0.0
    %712 = vmatpush.xpose.msra.mxu0 0.0
    %713 = vmatpush.xpose.msra.mxu0 0.0
    %714 = vmatpush.xpose.msra.mxu0 0.0
    %715 = vmatpush.xpose.msra.mxu0 %v698
    %716 = vmatmul.f32.gmra.mxu0 %v696
    %v717 = vpop.f32.mrf.mxu0
    %v718 = vadd.f32 0.0, %v717
    %719 = vdwg.mxu0
    %v720 = vsel %vm162, %v718, -inf
    %721 = vmax.xlane.f32.xlu0 %v720
    %v722 = vpop.xlane.xlu0 %721
    %v723 = vsub.f32 %v718, %v722
    %v724 = vmul.f32 %v723, 1.442695
    %v725 = vpow.pop %v724
    %v726 = vsel %vm162, %v725, 0.0
    %727 = vadd.xlane.f32.xlu0 %v726
    %v728 = vpop.xlane.xlu0 %727
    %v729 = vrcp.pop %v728
    %v730 = vmul.f32 %v725, %v729
    %731 = vrot.lane.b32.xlu0 %v157, 48
    %v732 = vpop.permute.xlu0 %731
    %v735 = vsel %vm162, %v730, 0
    %737 = vmatpush.msra.mxu0 0.0
    %738 = vmatpush.msra.mxu0 0.0
    %739 = vmatpush.msra.mxu0 0.0
    %740 = vmatpush.msra.mxu0 0.0
    %741 = vmatpush.msra.mxu0 0.0
    %742 = vmatpush.msra.mxu0 0.0
    %743 = vmatpush.msra.mxu0 0.0
    %744 = vmatpush.msra.mxu0 0.0
    %745 = vmatpush.msra.mxu0 0.0
    %746 = vmatpush.msra.mxu0 0.0
    %747 = vmatpush.msra.mxu0 0.0
    %748 = vmatpush.msra.mxu0 0.0
    %749 = vmatpush.msra.mxu0 0.0
    %750 = vmatpush.msra.mxu0 0.0
    %751 = vmatpush.msra.mxu0 0.0
    %752 = vmatpush.msra.mxu0 %v732
    %753 = vmatmul.f32.gmra.mxu0 %v735
    %v754 = vpop.f32.mrf.mxu0
    %v755 = vadd.f32 0.0, %v754
    %756 = vdwg.mxu0
    %v758 = vsel %vm162, %v755, 0
    %760 = vmatpush.msra.mxu0 0.0
    %761 = vmatpush.msra.mxu0 0.0
    %762 = vmatpush.msra.mxu0 0.0
    %763 = vmatpush.msra.mxu0 0.0
    %764 = vmatpush.msra.mxu0 0.0
    %765 = vmatpush.msra.mxu0 0.0
    %766 = vmatpush.msra.mxu0 0.0
    %767 = vmatpush.msra.mxu0 0.0
    %768 = vmatpush.msra.mxu0 0.0
    %769 = vmatpush.msra.mxu0 0.0
    %770 = vmatpush.msra.mxu0 0.0
    %771 = vmatpush.msra.mxu0 0.0
    %772 = vmatpush.msra.mxu0 0.0
    %773 = vmatpush.msra.mxu0 0.0
    %774 = vmatpush.msra.mxu0 0.0
    %775 = vmatpush.msra.mxu0 %v402
    %776 = vmatmul.f32.gmra.mxu0 %v758
    %v777 = vpop.f32.mrf.mxu0
    %v778 = vadd.f32 0.0, %v777
    %779 = vdwg.mxu0
    %v780 = vadd.f32 %v690, %v778
    %781 = vrot.lane.b32.xlu0 %v157, 104
    %v782 = vpop.permute.xlu0 %781
    %783 = vrot.lane.b32.xlu0 %v157, 72
    %v784 = vpop.permute.xlu0 %783
    %v785 = vsel %vm162, %v782, 0
    %v787 = vsel %vm162, %v784, 0
    %789 = vmatpush.xpose.msra.mxu0 0.0
    %790 = vmatpush.xpose.msra.mxu0 0.0
    %791 = vmatpush.xpose.msra.mxu0 0.0
    %792 = vmatpush.xpose.msra.mxu0 0.0
    %793 = vmatpush.xpose.msra.mxu0 0.0
    %794 = vmatpush.xpose.msra.mxu0 0.0
    %795 = vmatpush.xpose.msra.mxu0 0.0
    %796 = vmatpush.xpose.msra.mxu0 0.0
    %797 = vmatpush.xpose.msra.mxu0 0.0
    %798 = vmatpush.xpose.msra.mxu0 0.0
    %799 = vmatpush.xpose.msra.mxu0 0.0
    %800 = vmatpush.xpose.msra.mxu0 0.0
    %801 = vmatpush.xpose.msra.mxu0 0.0
    %802 = vmatpush.xpose.msra.mxu0 0.0
    %803 = vmatpush.xpose.msra.mxu0 0.0
    %804 = vmatpush.xpose.msra.mxu0 %v787
    %805 = vmatmul.f32.gmra.mxu0 %v785
    %v806 = vpop.f32.mrf.mxu0
    %v807 = vadd.f32 0.0, %v806
    %808 = vdwg.mxu0
    %v809 = vsel %vm162, %v807, -inf
    %810 = vmax.xlane.f32.xlu0 %v809
    %v811 = vpop.xlane.xlu0 %810
    %v812 = vsub.f32 %v807, %v811
    %v813 = vmul.f32 %v812, 1.442695
    %v814 = vpow.pop %v813
    %v815 = vsel %vm162, %v814, 0.0
    %816 = vadd.xlane.f32.xlu0 %v815
    %v817 = vpop.xlane.xlu0 %816
    %v818 = vrcp.pop %v817
    %v819 = vmul.f32 %v814, %v818
    %820 = vrot.lane.b32.xlu0 %v157, 40
    %v821 = vpop.permute.xlu0 %820
    %v824 = vsel %vm162, %v819, 0
    %826 = vmatpush.msra.mxu0 0.0
    %827 = vmatpush.msra.mxu0 0.0
    %828 = vmatpush.msra.mxu0 0.0
    %829 = vmatpush.msra.mxu0 0.0
    %830 = vmatpush.msra.mxu0 0.0
    %831 = vmatpush.msra.mxu0 0.0
    %832 = vmatpush.msra.mxu0 0.0
    %833 = vmatpush.msra.mxu0 0.0
    %834 = vmatpush.msra.mxu0 0.0
    %835 = vmatpush.msra.mxu0 0.0
    %836 = vmatpush.msra.mxu0 0.0
    %837 = vmatpush.msra.mxu0 0.0
    %838 = vmatpush.msra.mxu0 0.0
    %839 = vmatpush.msra.mxu0 0.0
    %840 = vmatpush.msra.mxu0 0.0
    %841 = vmatpush.msra.mxu0 %v821
    %842 = vmatmul.f32.gmra.mxu0 %v824
    %v843 = vpop.f32.mrf.mxu0
    %v844 = vadd.f32 0.0, %v843
    %845 = vdwg.mxu0
    %v847 = vsel %vm162, %v844, 0
    %849 = vmatpush.msra.mxu0 0.0
    %850 = vmatpush.msra.mxu0 0.0
    %851 = vmatpush.msra.mxu0 0.0
    %852 = vmatpush.msra.mxu0 0.0
    %853 = vmatpush.msra.mxu0 0.0
    %854 = vmatpush.msra.mxu0 0.0
    %855 = vmatpush.msra.mxu0 0.0
    %856 = vmatpush.msra.mxu0 0.0
    %857 = vmatpush.msra.mxu0 0.0
    %858 = vmatpush.msra.mxu0 0.0
    %859 = vmatpush.msra.mxu0 0.0
    %860 = vmatpush.msra.mxu0 0.0
    %861 = vmatpush.msra.mxu0 0.0
    %862 = vmatpush.msra.mxu0 0.0
    %863 = vmatpush.msra.mxu0 0.0
    %864 = vmatpush.msra.mxu0 %v492
    %865 = vmatmul.f32.gmra.mxu0 %v847
    %v866 = vpop.f32.mrf.mxu0
    %v867 = vadd.f32 0.0, %v866
    %868 = vdwg.mxu0
    %v869 = vadd.f32 %v780, %v867
    %v870 = vld [vmem:[#allocation8] sm:$0x1]
    %v871 = vperm.slane %v870, 0
    %v872 = vadd.f32 %v516, %v871
    %v873 = vadd.f32 %v869, %v871
    %v874 = vadd.f32 %v119, %v872
    %v875 = vadd.f32 %v120, %v873
    %v876 = vld [vmem:[#allocation10] sm:$0xff]
    %v877 = vld [vmem:[#allocation10 + $0x8] sm:$0xff]
    %v878 = vld [vmem:[#allocation10 + $0x10] sm:$0xff]
    %v879 = vld [vmem:[#allocation10 + $0x18] sm:$0xff]
    %v880 = vld [vmem:[#allocation8 + $0x1] sm:$0x1]
    %v881 = vperm.slane %v880, 0
    %v883 = vsel %vm129, %v874, 0
    %v886 = vsel %vm129, %v875, 0
    %888 = vmatpush.msra.mxu0 0.0
    %889 = vmatpush.msra.mxu0 0.0
    %890 = vmatpush.msra.mxu0 0.0
    %891 = vmatpush.msra.mxu0 0.0
    %892 = vmatpush.msra.mxu0 0.0
    %893 = vmatpush.msra.mxu0 0.0
    %894 = vmatpush.msra.mxu0 0.0
    %895 = vmatpush.msra.mxu0 0.0
    %896 = vmatpush.msra.mxu0 0.0
    %897 = vmatpush.msra.mxu0 0.0
    %898 = vmatpush.msra.mxu0 0.0
    %899 = vmatpush.msra.mxu0 0.0
    %900 = vmatpush.msra.mxu0 %v879
    %901 = vmatpush.msra.mxu0 %v878
    %902 = vmatpush.msra.mxu0 %v877
    %903 = vmatpush.msra.mxu0 %v876
    %904 = vmatmul.f32.gmra.mxu0 %v883
    %v905 = vpop.f32.mrf.mxu0
    %v906 = vadd.f32 %v881, %v905
    %907 = vmatmul.f32.gmra.mxu0 %v886
    %v908 = vpop.f32.mrf.mxu0
    %v909 = vadd.f32 %v881, %v908
    %910 = vdwg.mxu0
    %v911 = vmax.f32 %v906, 0.0
    %v912 = vmax.f32 %v909, 0.0
    %v913 = vld [vmem:[#allocation11] sm:$0xff]
    %v914 = vld [vmem:[#allocation11 + $0x8] sm:$0xff]
    %v915 = vld [vmem:[#allocation11 + $0x10] sm:$0xff]
    %v916 = vld [vmem:[#allocation11 + $0x18] sm:$0xff]
    %v918 = vsel %vm129, %v911, 0
    %v921 = vsel %vm129, %v912, 0
    %923 = vmatpush.msra.mxu0 0.0
    %924 = vmatpush.msra.mxu0 0.0
    %925 = vmatpush.msra.mxu0 0.0
    %926 = vmatpush.msra.mxu0 0.0
    %927 = vmatpush.msra.mxu0 0.0
    %928 = vmatpush.msra.mxu0 0.0
    %929 = vmatpush.msra.mxu0 0.0
    %930 = vmatpush.msra.mxu0 0.0
    %931 = vmatpush.msra.mxu0 0.0
    %932 = vmatpush.msra.mxu0 0.0
    %933 = vmatpush.msra.mxu0 0.0
    %934 = vmatpush.msra.mxu0 0.0
    %935 = vmatpush.msra.mxu0 %v916
    %936 = vmatpush.msra.mxu0 %v915
    %937 = vmatpush.msra.mxu0 %v914
    %938 = vmatpush.msra.mxu0 %v913
    %939 = vmatmul.f32.gmra.mxu0 %v918
    %v940 = vpop.f32.mrf.mxu0
    %v941 = vadd.f32 0.0, %v940
    %942 = vmatmul.f32.gmra.mxu0 %v921
    %v943 = vpop.f32.mrf.mxu0
    %v944 = vadd.f32 0.0, %v943
    %945 = vdwg.mxu0
    %v946 = vadd.f32 %v874, %v941
    %v947 = vadd.f32 %v875, %v944
    %v948 = vld [vmem:[#allocation8 + $0x2] sm:$0x1]
    %v949 = vperm.slane %v948, 0
    %v950 = vadd.f32 %v946, %v949
    %v951 = vadd.f32 %v947, %v949
    %952 = vst.msk [vmem:[#allocation13] sm:$0xff] %vm129, %v950
    %953 = vst.msk [vmem:[#allocation13 + $0x8] sm:$0xff] %vm129, %v951
    // Predicated region
    $region54: #{tpu_custom_call.1} parent=1 // pred_check
      _
    $region55: #{tpu_custom_call.1} parent=1 // pred_check_branch
      %955 = sbr.rel (0) target = $region57
    $region56: #{tpu_custom_call.1} parent=1 // pred_region
      %957 = vsyncadd [#allocation4], 0
      %s958 = sshll.u32 [#allocation13], 4
      %s959 = int_to_ptr.vmem [resolvable:$true] %s958
      %s960 = sshll.u32 %s7, 4
      %s961 = int_to_ptr.hbm [resolvable:$true] %s960
      %966 = dma.vmem_to_hbm [thread:$0]  %s959, 256, %s961, [#allocation4], 128, 128, 8
    $region57: #{tpu_custom_call.1} parent=1 // pred_fallthru
      _
    // Predicated region
    $region58: #{tpu_custom_call.1} parent=1 // pred_check
      _
    $region59: #{tpu_custom_call.1} parent=1 // pred_check_branch
      %968 = sbr.rel (0) target = $region61
    $region60: #{tpu_custom_call.1} parent=1 // pred_region
      %970 = dma.done [#allocation4], 256
    $region61: #{tpu_custom_call.1} parent=1 // pred_fallthru
      _
    %971 = vsyncpa [#allocation3], 1
    %972 = vsyncpa [#allocation6], 1
    %973 = vsyncpa [#allocation9], 1
    %974 = vsyncpa [#allocation12], 1
    %975 = vsyncpa [#allocation4], 1

</llo_original>
